<compile_context>
chip_gen: v7x
topology: tpu7x:2x2x1
jax: 0.10.0
libtpu: 0.0.40
codegen_flags: <defaults>
</compile_context>

<pallas_src>
import math

import jax
import jax.numpy as jnp
from jax import lax
from jax.experimental import pallas as pl
from jax.experimental.pallas import tpu as pltpu


def _make_textcnn_kernel(kernel_sizes, filters, k_max, c_dim):
    """Fused kernel: im2col conv GEMM + masked max-pool + SE gate + globals."""

    def kernel(seq_ref, wc_ref, bc_ref, w1_ref, b1_ref, w2_ref, b2_ref, o_ref):
        seq3 = seq_ref[...]                                  # [Bt, L, H] f32
        bt, l, h = seq3.shape

        # ---- global features per row: [first token | mean | max] ----
        first = seq3[:, 0, :]                                # [Bt, H]
        mean = jnp.mean(seq3, axis=1)                        # [Bt, H]
        mx = jnp.max(seq3, axis=1)                           # [Bt, H]
        glob = jnp.concatenate([first, mean, mx], axis=-1)   # [Bt, 3H]

        # ---- im2col: zero-pad time axis, take k_max shifted views, lane-concat.
        #      Out-of-row windows are zeros; they only feed zero-weight columns
        #      or positions that get masked before the max. ----
        pad = jnp.zeros((bt, k_max - 1, h), seq3.dtype)
        seq_pad = jnp.concatenate([seq3, pad], axis=1)       # [Bt, L+kmax-1, H]
        pieces = [seq_pad[:, j:j + l, :] for j in range(k_max)]
        patch = jnp.concatenate(pieces, axis=-1)             # [Bt, L, kmax*H]
        patch = patch.reshape(bt * l, k_max * h)             # [Bt*L, kmax*H]

        # ---- single fused conv GEMM for all branches + bias + ReLU ----
        acts = jnp.dot(patch, wc_ref[...],
                       preferred_element_type=jnp.float32)   # [Bt*L, C]
        acts = jnp.maximum(acts + bc_ref[...], 0.0)
        acts3 = acts.reshape(bt, l, c_dim)                   # [Bt, L, C]

        # ---- masked max-over-time per branch (mask invalid tail to 0, exact
        #      because post-ReLU values are >= 0) ----
        pos = lax.broadcasted_iota(jnp.int32, (bt, l, 1), 1)
        pooled = []
        for ci, k in enumerate(kernel_sizes):
            branch = acts3[:, :, ci * filters:(ci + 1) * filters]   # 128-aligned
            masked = jnp.where(pos < (l - k + 1), branch, 0.0)
            pooled.append(jnp.max(masked, axis=1))           # [Bt, F]
        cat = jnp.concatenate(pooled, axis=-1)                # [Bt, C]

        # ---- SpatialSE: x * sigmoid(fc2(relu(fc1(x)))) ----
        hdn = jnp.dot(cat, w1_ref[...], preferred_element_type=jnp.float32)
        hdn = jnp.maximum(hdn + b1_ref[...], 0.0)             # [Bt, Cr]
        gate = jnp.dot(hdn, w2_ref[...], preferred_element_type=jnp.float32)
        gate = jax.nn.sigmoid(gate + b2_ref[...])             # [Bt, C]
        gated = cat * gate                                    # [Bt, C]

        # ---- output: gated conv features in the lane-aligned [0:C) range
        #      (3 unmasked vregs), 96-wide global tail after it. ----
        o_ref[:, :c_dim] = gated.astype(o_ref.dtype)
        o_ref[:, c_dim:] = glob.astype(o_ref.dtype)

    return kernel


def textcnn_block(seq, conv_params, se_params):
    """Fused TextCNNBlock forward (inference; dropout is identity).

    seq:          [B, L, H] float32
    conv_params:  list of (w_k [k, H, F], b_k [1, F]) per kernel size
    se_params:    (w1 [C, Cr], b1 [1, Cr], w2 [Cr, C], b2 [1, C]), C = F*len(convs)
    returns:      [B, C + 3*H] float32
    """
    b, l, h = seq.shape
    f = int(conv_params[0][0].shape[-1])
    kernel_sizes = tuple(int(wk.shape[0]) for wk, _ in conv_params)
    k_max = max(kernel_sizes)
    n_convs = len(conv_params)
    w1, b1, w2, b2 = se_params
    c, cr = w1.shape
    assert c == f * n_convs
    assert l >= k_max, "sequence must be at least as long as the largest kernel"
    out_dim = c + 3 * h

    # --- offline weight fusion: one [kmax*H, C] conv weight (zero rows for
    #     branches with k < kmax) and one [1, C] fused bias ---
    w_blocks = []
    for wk, _ in conv_params:
        k = int(wk.shape[0])
        wkf = wk.reshape(k * h, f)
        if k < k_max:
            wkf = jnp.concatenate(
                [wkf, jnp.zeros(((k_max - k) * h, f), wk.dtype)], axis=0)
        w_blocks.append(wkf)
    wc = jnp.concatenate(w_blocks, axis=1)                       # [kmax*H, C]
    bc = jnp.concatenate([bk for _, bk in conv_params], axis=1)  # [1, C]

    # --- batch folding: Bt rows per grid step ---
    if b <= 8:
        bt = b                      # single step; blocks equal full array dims
    else:
        bt = 8                      # multiple of 8 (sublane rule when grid > 1)
        # grow toward Bt*L ~ 256 (MXU M alignment) while keeping grid >= 2 (v7x)
        while bt * l < 256 and bt * 4 <= b:
            bt *= 2
    b_pad = pl.cdiv(b, bt) * bt
    seq_in = seq if b_pad == b else jnp.pad(
        seq, ((0, b_pad - b), (0, 0), (0, 0)))
    grid = b_pad // bt

    # --- BlockSpecs: one (Bt,L,H) slab per step; weights are full-array blocks
    #     with constant index maps (VMEM-resident across the whole grid). ---
    in_specs = [
        pl.BlockSpec((bt, l, h), lambda i: (i, 0, 0)),
        pl.BlockSpec((k_max * h, c), lambda i: (0, 0)),
        pl.BlockSpec((1, c), lambda i: (0, 0)),
        pl.BlockSpec((c, cr), lambda i: (0, 0)),
        pl.BlockSpec((1, cr), lambda i: (0, 0)),
        pl.BlockSpec((cr, c), lambda i: (0, 0)),
        pl.BlockSpec((1, c), lambda i: (0, 0)),
    ]
    out_specs = pl.BlockSpec((bt, out_dim), lambda i: (i, 0))

    # Advisory cost estimate for XLA's scheduler.
    flops = int(b_pad * (2 * l * (k_max * h) * c + 2 * c * cr + 2 * cr * c))
    bytes_accessed = int((seq_in.size + wc.size + bc.size + w1.size + b1.size
                          + w2.size + b2.size + b_pad * out_dim) * 4)
    cost = pl.CostEstimate(flops=flops, transcendentals=int(b_pad * c),
                           bytes_accessed=bytes_accessed)

    out = pl.pallas_call(
        _make_textcnn_kernel(kernel_sizes, f, k_max, c),
        out_shape=jax.ShapeDtypeStruct((b_pad, out_dim), seq.dtype),
        grid_spec=pltpu.PrefetchScalarGridSpec(
            num_scalar_prefetch=0,
            grid=(grid,),
            in_specs=in_specs,
            out_specs=out_specs,
        ),
        compiler_params=pltpu.CompilerParams(
            dimension_semantics=("parallel",),   # batch tiles shard across v7x TCs
        ),
        cost_estimate=cost,
    )(seq_in, wc, bc, w1, b1, w2, b2)

    return out[:b] if b_pad != b else out


def _ref_textcnn_block(seq, conv_params, se_params):
    """Pure-JAX reference matching the PyTorch forward (eval mode)."""
    hp = jax.lax.Precision.HIGHEST
    _, l, _ = seq.shape
    glob = jnp.concatenate(
        [seq[:, 0, :], seq.mean(axis=1), seq.max(axis=1)], axis=-1)
    feats = []
    for wk, bk in conv_params:
        k = wk.shape[0]
        t = l - k + 1
        conv = sum(
            jnp.einsum("blh,hf->blf", seq[:, j:j + t, :], wk[j], precision=hp)
            for j in range(k)) + bk.reshape(1, 1, -1)
        feats.append(jnp.max(jax.nn.relu(conv), axis=1))
    cat = jnp.concatenate(feats, axis=-1)
    w1, b1, w2, b2 = se_params
    hdn = jax.nn.relu(jnp.dot(cat, w1, precision=hp) + b1)
    gate = jax.nn.sigmoid(jnp.dot(hdn, w2, precision=hp) + b2)
    return jnp.concatenate([cat * gate, glob], axis=-1)


if __name__ == "__main__":
    B, L, HID = 2, 16, 32              # batch=2, seq_len=16, hid=32
    KERNELS = (3, 4, 5)
    FILTERS = 128
    C = FILTERS * len(KERNELS)         # 384 SE channels
    CR = C // 8                        # SpatialSE r=8 -> 48

    key = jax.random.PRNGKey(0)
    keys = iter(jax.random.split(key, 1 + 2 * len(KERNELS) + 4))

    def uniform(k, shape, fan_in):
        lim = 1.0 / math.sqrt(fan_in)
        return jax.random.uniform(k, shape, jnp.float32, -lim, lim)

    seq = jax.random.normal(next(keys), (B, L, HID), dtype=jnp.float32)

    # Conv1d(hid, filters, k) weights stored as [k, hid, filters] (torch [F,H,k]
    # transposed); init mimics nn.Conv1d default U(+/-1/sqrt(hid*k)).
    conv_params = []
    for k in KERNELS:
        wk = uniform(next(keys), (k, HID, FILTERS), HID * k)
        bk = uniform(next(keys), (1, FILTERS), HID * k)
        conv_params.append((wk, bk))

    # SpatialSE Linear weights stored as [in, out] (torch transpose), default init.
    w1 = uniform(next(keys), (C, CR), C)
    b1 = uniform(next(keys), (1, CR), C)
    w2 = uniform(next(keys), (CR, C), CR)
    b2 = uniform(next(keys), (1, C), CR)
    se_params = (w1, b1, w2, b2)

    out = textcnn_block(seq, conv_params, se_params)
    out = jax.block_until_ready(out)

    ref = _ref_textcnn_block(seq, conv_params, se_params)
    assert out.shape == (B, C + 3 * HID)
    err = jnp.max(jnp.abs(out - ref))
    assert jnp.allclose(out, ref, atol=5e-5, rtol=5e-5), (
        f"mismatch vs reference, max abs err {err}")

    print("KERNEL_OK")
</pallas_src>

<mosaic_0001>
module attributes {stable_mosaic.version = 11 : i64} {
  func.func @kernel(%arg0: i32, %arg1: memref<2x16x32xf32, #tpu.memory_space<vmem>>, %arg2: memref<160x384xf32, #tpu.memory_space<vmem>>, %arg3: memref<1x384xf32, #tpu.memory_space<vmem>>, %arg4: memref<384x48xf32, #tpu.memory_space<vmem>>, %arg5: memref<1x48xf32, #tpu.memory_space<vmem>>, %arg6: memref<48x384xf32, #tpu.memory_space<vmem>>, %arg7: memref<1x384xf32, #tpu.memory_space<vmem>>, %arg8: memref<2x480xf32, #tpu.memory_space<vmem>>) attributes {dimension_semantics = [#tpu.dimension_semantics<parallel>], iteration_bounds = array<i64: 1>, scalar_prefetch = 0 : i64, scratch_operands = 0 : i64, tpu.core_type = #tpu.core_type<tc>, window_params = [{transform_indices = @transform_0, window_bounds = array<i64: 2, 16, 32>}, {pipeline_mode = #tpu.pipeline_mode<synchronous>, transform_indices = @transform_1, window_bounds = array<i64: 160, 384>}, {pipeline_mode = #tpu.pipeline_mode<synchronous>, transform_indices = @transform_2, window_bounds = array<i64: 1, 384>}, {pipeline_mode = #tpu.pipeline_mode<synchronous>, transform_indices = @transform_3, window_bounds = array<i64: 384, 48>}, {pipeline_mode = #tpu.pipeline_mode<synchronous>, transform_indices = @transform_4, window_bounds = array<i64: 1, 48>}, {pipeline_mode = #tpu.pipeline_mode<synchronous>, transform_indices = @transform_5, window_bounds = array<i64: 48, 384>}, {pipeline_mode = #tpu.pipeline_mode<synchronous>, transform_indices = @transform_6, window_bounds = array<i64: 1, 384>}, {transform_indices = @transform_7, window_bounds = array<i64: 2, 480>}]} {
    %c0 = arith.constant 0 : index
    %c0_0 = arith.constant 0 : index
    %c0_1 = arith.constant 0 : index
    %0 = vector.load %arg1[%c0, %c0_0, %c0_1] : memref<2x16x32xf32, #tpu.memory_space<vmem>>, vector<2x16x32xf32>
    %1 = vector.extract_strided_slice %0 {offsets = [0, 0, 0], sizes = [2, 1, 32], strides = [1, 1, 1]} : vector<2x16x32xf32> to vector<2x1x32xf32>
    %2 = vector.shape_cast %1 : vector<2x1x32xf32> to vector<2x32xf32>
    %cst = arith.constant dense<0.000000e+00> : vector<2x32xf32>
    %3 = vector.multi_reduction <add>, %0, %cst [1] : vector<2x16x32xf32> to vector<2x32xf32>
    %cst_2 = arith.constant 1.600000e+01 : f32
    %4 = vector.broadcast %cst_2 : f32 to vector<2x32xf32>
    %5 = arith.divf %3, %4 : vector<2x32xf32>
    %cst_3 = arith.constant dense<0xFF800000> : vector<2x32xf32>
    %6 = vector.multi_reduction <maximumf>, %0, %cst_3 [1] : vector<2x16x32xf32> to vector<2x32xf32>
    %7 = tpu.concatenate %2, %5, %6 in 1 : vector<2x32xf32>, vector<2x32xf32>, vector<2x32xf32> -> vector<2x96xf32>
    %cst_4 = arith.constant 0.000000e+00 : f32
    %8 = vector.broadcast %cst_4 : f32 to vector<2x4x32xf32>
    %9 = tpu.concatenate %0, %8 in 1 : vector<2x16x32xf32>, vector<2x4x32xf32> -> vector<2x20x32xf32>
    %10 = vector.extract_strided_slice %9 {offsets = [0, 0, 0], sizes = [2, 16, 32], strides = [1, 1, 1]} : vector<2x20x32xf32> to vector<2x16x32xf32>
    %11 = vector.extract_strided_slice %9 {offsets = [0, 1, 0], sizes = [2, 16, 32], strides = [1, 1, 1]} : vector<2x20x32xf32> to vector<2x16x32xf32>
    %12 = vector.extract_strided_slice %9 {offsets = [0, 2, 0], sizes = [2, 16, 32], strides = [1, 1, 1]} : vector<2x20x32xf32> to vector<2x16x32xf32>
    %13 = vector.extract_strided_slice %9 {offsets = [0, 3, 0], sizes = [2, 16, 32], strides = [1, 1, 1]} : vector<2x20x32xf32> to vector<2x16x32xf32>
    %14 = vector.extract_strided_slice %9 {offsets = [0, 4, 0], sizes = [2, 16, 32], strides = [1, 1, 1]} : vector<2x20x32xf32> to vector<2x16x32xf32>
    %15 = tpu.concatenate %10, %11, %12, %13, %14 in 2 : vector<2x16x32xf32>, vector<2x16x32xf32>, vector<2x16x32xf32>, vector<2x16x32xf32>, vector<2x16x32xf32> -> vector<2x16x160xf32>
    %16 = vector.shape_cast %15 : vector<2x16x160xf32> to vector<32x160xf32>
    %c0_5 = arith.constant 0 : index
    %c0_6 = arith.constant 0 : index
    %17 = vector.load %arg2[%c0_5, %c0_6] : memref<160x384xf32, #tpu.memory_space<vmem>>, vector<160x384xf32>
    %cst_7 = arith.constant dense<0.000000e+00> : vector<32x384xf32>
    %18 = tpu.matmul %16, %17, %cst_7 {dimension_numbers = #tpu.dot_dimension_numbers<[1], [0], [0], [1], [0, 0, 1, 1], [], []>} : vector<32x160xf32>, vector<160x384xf32>, vector<32x384xf32> -> vector<32x384xf32>
    %c0_8 = arith.constant 0 : index
    %c0_9 = arith.constant 0 : index
    %19 = vector.load %arg3[%c0_8, %c0_9] : memref<1x384xf32, #tpu.memory_space<vmem>>, vector<1x384xf32>
    %20 = vector.broadcast %19 : vector<1x384xf32> to vector<32x384xf32>
    %21 = arith.addf %18, %20 : vector<32x384xf32>
    %cst_10 = arith.constant 0.000000e+00 : f32
    %22 = vector.broadcast %cst_10 : f32 to vector<32x384xf32>
    %23 = arith.maximumf %21, %22 : vector<32x384xf32>
    %24 = vector.shape_cast %23 : vector<32x384xf32> to vector<2x16x384xf32>
    %25 = tpu.iota {dimensions = array<i32: 1>} : vector<2x16x1xi32>
    %26 = vector.extract_strided_slice %24 {offsets = [0, 0, 0], sizes = [2, 16, 128], strides = [1, 1, 1]} : vector<2x16x384xf32> to vector<2x16x128xf32>
    %c14_i32 = arith.constant 14 : i32
    %27 = vector.broadcast %c14_i32 : i32 to vector<2x16x1xi32>
    %28 = arith.cmpi slt, %25, %27 : vector<2x16x1xi32>
    %cst_11 = arith.constant 0.000000e+00 : f32
    %29 = vector.shape_cast %28 : vector<2x16x1xi1> to vector<2x16x1xi1>
    %30 = vector.broadcast %29 : vector<2x16x1xi1> to vector<2x16x128xi1>
    %31 = vector.broadcast %cst_11 : f32 to vector<2x16x128xf32>
    %32 = arith.select %30, %26, %31 : vector<2x16x128xi1>, vector<2x16x128xf32>
    %cst_12 = arith.constant dense<0xFF800000> : vector<2x128xf32>
    %33 = vector.multi_reduction <maximumf>, %32, %cst_12 [1] : vector<2x16x128xf32> to vector<2x128xf32>
    %34 = vector.extract_strided_slice %24 {offsets = [0, 0, 128], sizes = [2, 16, 128], strides = [1, 1, 1]} : vector<2x16x384xf32> to vector<2x16x128xf32>
    %c13_i32 = arith.constant 13 : i32
    %35 = vector.broadcast %c13_i32 : i32 to vector<2x16x1xi32>
    %36 = arith.cmpi slt, %25, %35 : vector<2x16x1xi32>
    %cst_13 = arith.constant 0.000000e+00 : f32
    %37 = vector.shape_cast %36 : vector<2x16x1xi1> to vector<2x16x1xi1>
    %38 = vector.broadcast %37 : vector<2x16x1xi1> to vector<2x16x128xi1>
    %39 = vector.broadcast %cst_13 : f32 to vector<2x16x128xf32>
    %40 = arith.select %38, %34, %39 : vector<2x16x128xi1>, vector<2x16x128xf32>
    %cst_14 = arith.constant dense<0xFF800000> : vector<2x128xf32>
    %41 = vector.multi_reduction <maximumf>, %40, %cst_14 [1] : vector<2x16x128xf32> to vector<2x128xf32>
    %42 = vector.extract_strided_slice %24 {offsets = [0, 0, 256], sizes = [2, 16, 128], strides = [1, 1, 1]} : vector<2x16x384xf32> to vector<2x16x128xf32>
    %c12_i32 = arith.constant 12 : i32
    %43 = vector.broadcast %c12_i32 : i32 to vector<2x16x1xi32>
    %44 = arith.cmpi slt, %25, %43 : vector<2x16x1xi32>
    %cst_15 = arith.constant 0.000000e+00 : f32
    %45 = vector.shape_cast %44 : vector<2x16x1xi1> to vector<2x16x1xi1>
    %46 = vector.broadcast %45 : vector<2x16x1xi1> to vector<2x16x128xi1>
    %47 = vector.broadcast %cst_15 : f32 to vector<2x16x128xf32>
    %48 = arith.select %46, %42, %47 : vector<2x16x128xi1>, vector<2x16x128xf32>
    %cst_16 = arith.constant dense<0xFF800000> : vector<2x128xf32>
    %49 = vector.multi_reduction <maximumf>, %48, %cst_16 [1] : vector<2x16x128xf32> to vector<2x128xf32>
    %50 = tpu.concatenate %33, %41, %49 in 1 : vector<2x128xf32>, vector<2x128xf32>, vector<2x128xf32> -> vector<2x384xf32>
    %c0_17 = arith.constant 0 : index
    %c0_18 = arith.constant 0 : index
    %51 = vector.load %arg4[%c0_17, %c0_18] : memref<384x48xf32, #tpu.memory_space<vmem>>, vector<384x48xf32>
    %cst_19 = arith.constant dense<0.000000e+00> : vector<2x48xf32>
    %52 = tpu.matmul %50, %51, %cst_19 {dimension_numbers = #tpu.dot_dimension_numbers<[1], [0], [0], [1], [0, 0, 1, 1], [], []>} : vector<2x384xf32>, vector<384x48xf32>, vector<2x48xf32> -> vector<2x48xf32>
    %c0_20 = arith.constant 0 : index
    %c0_21 = arith.constant 0 : index
    %53 = vector.load %arg5[%c0_20, %c0_21] : memref<1x48xf32, #tpu.memory_space<vmem>>, vector<1x48xf32>
    %54 = vector.broadcast %53 : vector<1x48xf32> to vector<2x48xf32>
    %55 = arith.addf %52, %54 : vector<2x48xf32>
    %cst_22 = arith.constant 0.000000e+00 : f32
    %56 = vector.broadcast %cst_22 : f32 to vector<2x48xf32>
    %57 = arith.maximumf %55, %56 : vector<2x48xf32>
    %c0_23 = arith.constant 0 : index
    %c0_24 = arith.constant 0 : index
    %58 = vector.load %arg6[%c0_23, %c0_24] : memref<48x384xf32, #tpu.memory_space<vmem>>, vector<48x384xf32>
    %cst_25 = arith.constant dense<0.000000e+00> : vector<2x384xf32>
    %59 = tpu.matmul %57, %58, %cst_25 {dimension_numbers = #tpu.dot_dimension_numbers<[1], [0], [0], [1], [0, 0, 1, 1], [], []>} : vector<2x48xf32>, vector<48x384xf32>, vector<2x384xf32> -> vector<2x384xf32>
    %c0_26 = arith.constant 0 : index
    %c0_27 = arith.constant 0 : index
    %60 = vector.load %arg7[%c0_26, %c0_27] : memref<1x384xf32, #tpu.memory_space<vmem>>, vector<1x384xf32>
    %61 = vector.broadcast %60 : vector<1x384xf32> to vector<2x384xf32>
    %62 = arith.addf %59, %61 : vector<2x384xf32>
    %63 = arith.negf %62 : vector<2x384xf32>
    %64 = math.exp %63 : vector<2x384xf32>
    %cst_28 = arith.constant 1.000000e+00 : f32
    %65 = vector.broadcast %cst_28 : f32 to vector<2x384xf32>
    %66 = arith.addf %65, %64 : vector<2x384xf32>
    %67 = arith.divf %65, %66 : vector<2x384xf32>
    %68 = arith.mulf %50, %67 : vector<2x384xf32>
    %c0_29 = arith.constant 0 : index
    %c0_30 = arith.constant 0 : index
    %69 = vector.load %arg8[%c0_29, %c0_30] : memref<2x480xf32, #tpu.memory_space<vmem>>, vector<2x384xf32>
    tpu.vector_store %arg8[%c0_29, %c0_30], %68 {strides = array<i32>} : memref<2x480xf32, #tpu.memory_space<vmem>>, vector<2x384xf32>,
    %c0_31 = arith.constant 0 : index
    %c384 = arith.constant 384 : index
    %70 = vector.load %arg8[%c0_31, %c384] : memref<2x480xf32, #tpu.memory_space<vmem>>, vector<2x96xf32>
    tpu.vector_store %arg8[%c0_31, %c384], %7 {strides = array<i32>} : memref<2x480xf32, #tpu.memory_space<vmem>>, vector<2x96xf32>,
    return
  }
  func.func @transform_0(%arg0: i32) -> (i32, i32, i32) {
    %c0_i32 = arith.constant 0 : i32
    %c0_i32_0 = arith.constant 0 : i32
    %c0_i32_1 = arith.constant 0 : i32
    return %arg0, %c0_i32, %c0_i32_0 : i32, i32, i32
  }
  func.func @transform_1(%arg0: i32) -> (i32, i32) {
    %c0_i32 = arith.constant 0 : i32
    %c0_i32_0 = arith.constant 0 : i32
    %c0_i32_1 = arith.constant 0 : i32
    return %c0_i32, %c0_i32_0 : i32, i32
  }
  func.func @transform_2(%arg0: i32) -> (i32, i32) {
    %c0_i32 = arith.constant 0 : i32
    %c0_i32_0 = arith.constant 0 : i32
    %c0_i32_1 = arith.constant 0 : i32
    return %c0_i32, %c0_i32_0 : i32, i32
  }
  func.func @transform_3(%arg0: i32) -> (i32, i32) {
    %c0_i32 = arith.constant 0 : i32
    %c0_i32_0 = arith.constant 0 : i32
    %c0_i32_1 = arith.constant 0 : i32
    return %c0_i32, %c0_i32_0 : i32, i32
  }
  func.func @transform_4(%arg0: i32) -> (i32, i32) {
    %c0_i32 = arith.constant 0 : i32
    %c0_i32_0 = arith.constant 0 : i32
    %c0_i32_1 = arith.constant 0 : i32
    return %c0_i32, %c0_i32_0 : i32, i32
  }
  func.func @transform_5(%arg0: i32) -> (i32, i32) {
    %c0_i32 = arith.constant 0 : i32
    %c0_i32_0 = arith.constant 0 : i32
    %c0_i32_1 = arith.constant 0 : i32
    return %c0_i32, %c0_i32_0 : i32, i32
  }
  func.func @transform_6(%arg0: i32) -> (i32, i32) {
    %c0_i32 = arith.constant 0 : i32
    %c0_i32_0 = arith.constant 0 : i32
    %c0_i32_1 = arith.constant 0 : i32
    return %c0_i32, %c0_i32_0 : i32, i32
  }
  func.func @transform_7(%arg0: i32) -> (i32, i32) {
    %c0_i32 = arith.constant 0 : i32
    %c0_i32_0 = arith.constant 0 : i32
    return %arg0, %c0_i32 : i32, i32
  }
}

</mosaic_0001>

<llo_original>
// kernel: tpu_custom_call.1
$region0: #{tpu_custom_call.1}
  #allocation0 [shape = 'u32[]', space=smem, size = 0x4, offset = 0x4, fixed_abs, tag = 'smem constant byte address 0x4 - core index']
  #allocation1 [shape = 'u32[144,128]{1,0:T(1,128)}', space=vmem, size = 0x12000, scoped, tag = 'internal scratch']
  %s0 = inlined_call_operand.vmem [shape: f32[2,16,32], index: 0, kind: input, shape index: {}]
  %s1 = inlined_call_operand.vmem [shape: f32[160,384], index: 1, kind: input, shape index: {}]
  %s2 = inlined_call_operand.vmem [shape: f32[1,384], index: 2, kind: input, shape index: {}]
  %s3 = inlined_call_operand.vmem [shape: f32[384,48], index: 3, kind: input, shape index: {}]
  %s4 = inlined_call_operand.vmem [shape: f32[1,48], index: 4, kind: input, shape index: {}]
  %s5 = inlined_call_operand.hbm [shape: f32[48,384], index: 5, kind: input, shape index: {}]
  %s6 = inlined_call_operand.vmem [shape: f32[1,384], index: 6, kind: input, shape index: {}]
  %s7 = inlined_call_operand.hbm [shape: f32[2,480], index: 7, kind: output, shape index: {}]
  %s8 = sld [smem:[#allocation0]]
  $region42: #{tpu_custom_call.1} parent=0
    _
  %s10 = ssub.s32 1, %s8
  %s11 = scalar_select 0, %s10, %s8
  $region1: #{tpu_custom_call.1} parent=0
    #allocation2 [shape = 'u8[73728]{0}', space=vmem, size = 0x12000, scoped, tag = 'input window, operand 5, single buffered']
    #allocation3 [shape = 's32[1]{0}', space=sflag, size = 0x4, scoped, tag = 'scoped memory for tpu_custom_call.1']
    #allocation4 [shape = 's32[1]{0}', space=sflag, size = 0x4, scoped, tag = 'scoped memory for tpu_custom_call.1']
    #allocation5 [shape = 'u8[4096]{0}', space=vmem, size = 0x1000, scoped, tag = 'output window, operand 0, single buffered']
    %12 = vsyncpa [#allocation3], 0
    %13 = vsyncpa [#allocation4], 0
    // Predicated region
    $region2: #{tpu_custom_call.1} parent=1 // pred_check
      _
    $region3: #{tpu_custom_call.1} parent=1 // pred_check_branch
      %15 = sbr.rel (0) target = $region5
    $region4: #{tpu_custom_call.1} parent=1 // pred_region
      _
    $region5: #{tpu_custom_call.1} parent=1 // pred_fallthru
      _
    // Predicated region
    $region6: #{tpu_custom_call.1} parent=1 // pred_check
      _
    $region7: #{tpu_custom_call.1} parent=1 // pred_check_branch
      %17 = sbr.rel (0) target = $region9
    $region8: #{tpu_custom_call.1} parent=1 // pred_region
      _
    $region9: #{tpu_custom_call.1} parent=1 // pred_fallthru
      _
    // Predicated region
    $region10: #{tpu_custom_call.1} parent=1 // pred_check
      _
    $region11: #{tpu_custom_call.1} parent=1 // pred_check_branch
      %19 = sbr.rel (0) target = $region13
    $region12: #{tpu_custom_call.1} parent=1 // pred_region
      _
    $region13: #{tpu_custom_call.1} parent=1 // pred_fallthru
      _
    // Predicated region
    $region14: #{tpu_custom_call.1} parent=1 // pred_check
      _
    $region15: #{tpu_custom_call.1} parent=1 // pred_check_branch
      %21 = sbr.rel (0) target = $region17
    $region16: #{tpu_custom_call.1} parent=1 // pred_region
      _
    $region17: #{tpu_custom_call.1} parent=1 // pred_fallthru
      _
    // Predicated region
    $region18: #{tpu_custom_call.1} parent=1 // pred_check
      _
    $region19: #{tpu_custom_call.1} parent=1 // pred_check_branch
      %23 = sbr.rel (0) target = $region21
    $region20: #{tpu_custom_call.1} parent=1 // pred_region
      _
    $region21: #{tpu_custom_call.1} parent=1 // pred_fallthru
      _
    // Predicated region
    $region22: #{tpu_custom_call.1} parent=1 // pred_check
      _
    $region23: #{tpu_custom_call.1} parent=1 // pred_check_branch
      %25 = sbr.rel (0) target = $region25
    $region24: #{tpu_custom_call.1} parent=1 // pred_region
      %s27 = ssub.s32 2304, 2304
      %28 = vsyncadd [#allocation3], %s27
      %s29 = sshll.u32 [#allocation2], 4
      %s30 = int_to_ptr.vmem [resolvable:$true] %s29
      %35 = dma.hbm_to_vmem [thread:$0]  %s5, 2304, %s30, [#allocation3], 384, 384, 24
    $region25: #{tpu_custom_call.1} parent=1 // pred_fallthru
      _
    // Predicated region
    $region26: #{tpu_custom_call.1} parent=1 // pred_check
      _
    $region27: #{tpu_custom_call.1} parent=1 // pred_check_branch
      %37 = sbr.rel (0) target = $region29
    $region28: #{tpu_custom_call.1} parent=1 // pred_region
      _
    $region29: #{tpu_custom_call.1} parent=1 // pred_fallthru
      _
    // Predicated region
    $region30: #{tpu_custom_call.1} parent=1 // pred_check
      _
    $region31: #{tpu_custom_call.1} parent=1 // pred_check_branch
      %39 = sbr.rel (0) target = $region33
    $region32: #{tpu_custom_call.1} parent=1 // pred_region
      %40 = dma.done [#allocation3], 2304
    $region33: #{tpu_custom_call.1} parent=1 // pred_fallthru
      _
    %v41 = vld [vmem:[%s0] sm:$0xff]
    %v42 = vld [vmem:[%s0 + $0x8] sm:$0xff]
    %v43 = vld [vmem:[%s0 + $0x10] sm:$0xff]
    %v44 = vld [vmem:[%s0 + $0x18] sm:$0xff]
    %vm45 = vcmask 261120
    %v46 = vsel %vm45, %v41, 0.0
    %v47 = vsel %vm45, %v42, 0.0
    %v48 = vadd.f32 %v46, %v47
    %v49 = vrot.slane %v48, 4
    %v50 = vadd.f32 %v48, %v49
    %v51 = vrot.slane %v50, 2
    %v52 = vadd.f32 %v50, %v51
    %v53 = vrot.slane %v52, 1
    %v54 = vadd.f32 %v52, %v53
    %v55 = vsel %vm45, %v43, 0.0
    %v56 = vsel %vm45, %v44, 0.0
    %v57 = vadd.f32 %v55, %v56
    %v58 = vrot.slane %v57, 4
    %v59 = vadd.f32 %v57, %v58
    %v60 = vrot.slane %v59, 2
    %v61 = vadd.f32 %v59, %v60
    %v62 = vrot.slane %v61, 1
    %v63 = vadd.f32 %v61, %v62
    %v64 = vrcp.pop 16.0
    %v65 = vmul.f32 %v54, %v64
    %v66 = vmul.f32 %v63, %v64
    %v67 = vsel %vm45, %v41, -inf
    %v68 = vsel %vm45, %v42, -inf
    %v69 = vmax.f32 %v67, %v68
    %v70 = vrot.slane %v69, 4
    %v71 = vmax.f32 %v69, %v70
    %v72 = vrot.slane %v71, 2
    %v73 = vmax.f32 %v71, %v72
    %v74 = vrot.slane %v73, 1
    %v75 = vmax.f32 %v73, %v74
    %v76 = vsel %vm45, %v43, -inf
    %v77 = vsel %vm45, %v44, -inf
    %v78 = vmax.f32 %v76, %v77
    %v79 = vrot.slane %v78, 4
    %v80 = vmax.f32 %v78, %v79
    %v81 = vrot.slane %v80, 2
    %v82 = vmax.f32 %v80, %v81
    %v83 = vrot.slane %v82, 1
    %v84 = vmax.f32 %v82, %v83
    %v87 = vrot.slane %v43, 7
    %vm88 = vcmask 1041409
    %v89 = vsel %vm88, %v87, %v41
    %v93 = vsel %vm88, %v66, %v65
    %94 = vrot.lane.b32.xlu0 %v93, 32
    %v95 = vpop.permute.xlu0 %94
    %v99 = vsel %vm88, %v84, %v75
    %100 = vrot.lane.b32.xlu0 %v99, 64
    %v101 = vpop.permute.xlu0 %100
    %v103 = vsel %vm45, %v89, %v95
    %vm104 = vcmask 523264
    %v105 = vsel %vm104, %v103, %v101
    %vm109 = vcmask 1046528
    %v110 = vrot.slane %v41, 1
    %v111 = vrot.slane %v42, 1
    %v112 = vsel %vm109, %v110, %v111
    %v113 = vrot.slane 0.0, 1
    %v114 = vsel %vm109, %v111, %v113
    %v115 = vrot.slane %v43, 1
    %v116 = vrot.slane %v44, 1
    %v117 = vsel %vm109, %v115, %v116
    %v118 = vsel %vm109, %v116, %v113
    %119 = vrot.lane.b32.xlu0 %v112, 32
    %v120 = vpop.permute.xlu0 %119
    %121 = vrot.lane.b32.xlu0 %v114, 32
    %v122 = vpop.permute.xlu0 %121
    %123 = vrot.lane.b32.xlu0 %v117, 32
    %v124 = vpop.permute.xlu0 %123
    %125 = vrot.lane.b32.xlu0 %v118, 32
    %v126 = vpop.permute.xlu0 %125
    %vm131 = vcmask 1045504
    %v132 = vrot.slane %v41, 2
    %v133 = vrot.slane %v42, 2
    %v134 = vsel %vm131, %v132, %v133
    %v135 = vrot.slane 0.0, 2
    %v136 = vsel %vm131, %v133, %v135
    %v137 = vrot.slane %v43, 2
    %v138 = vrot.slane %v44, 2
    %v139 = vsel %vm131, %v137, %v138
    %v140 = vsel %vm131, %v138, %v135
    %141 = vrot.lane.b32.xlu0 %v134, 64
    %v142 = vpop.permute.xlu0 %141
    %143 = vrot.lane.b32.xlu0 %v136, 64
    %v144 = vpop.permute.xlu0 %143
    %145 = vrot.lane.b32.xlu0 %v139, 64
    %v146 = vpop.permute.xlu0 %145
    %147 = vrot.lane.b32.xlu0 %v140, 64
    %v148 = vpop.permute.xlu0 %147
    %vm153 = vcmask 1044480
    %v154 = vrot.slane %v41, 3
    %v155 = vrot.slane %v42, 3
    %v156 = vsel %vm153, %v154, %v155
    %v157 = vrot.slane 0.0, 3
    %v158 = vsel %vm153, %v155, %v157
    %v159 = vrot.slane %v43, 3
    %v160 = vrot.slane %v44, 3
    %v161 = vsel %vm153, %v159, %v160
    %v162 = vsel %vm153, %v160, %v157
    %163 = vrot.lane.b32.xlu0 %v156, 96
    %v164 = vpop.permute.xlu0 %163
    %165 = vrot.lane.b32.xlu0 %v158, 96
    %v166 = vpop.permute.xlu0 %165
    %167 = vrot.lane.b32.xlu0 %v161, 96
    %v168 = vpop.permute.xlu0 %167
    %169 = vrot.lane.b32.xlu0 %v162, 96
    %v170 = vpop.permute.xlu0 %169
    %vm175 = vcmask 1043456
    %v176 = vrot.slane %v41, 4
    %v177 = vrot.slane %v42, 4
    %v178 = vsel %vm175, %v176, %v177
    %v179 = vrot.slane 0.0, 4
    %v180 = vsel %vm175, %v177, %v179
    %v181 = vrot.slane %v43, 4
    %v182 = vrot.slane %v44, 4
    %v183 = vsel %vm175, %v181, %v182
    %v184 = vsel %vm175, %v182, %v179
    %v185 = vsel %vm45, %v41, %v120
    %v186 = vsel %vm45, %v42, %v122
    %v187 = vsel %vm45, %v43, %v124
    %v188 = vsel %vm45, %v44, %v126
    %v189 = vsel %vm104, %v185, %v142
    %v190 = vsel %vm104, %v186, %v144
    %v191 = vsel %vm104, %v187, %v146
    %v192 = vsel %vm104, %v188, %v148
    %vm193 = vcmask 785408
    %v194 = vsel %vm193, %v189, %v164
    %v195 = vsel %vm193, %v190, %v166
    %v196 = vsel %vm193, %v191, %v168
    %v197 = vsel %vm193, %v192, %v170
    %v198 = vld [vmem:[%s1] sm:$0xff]
    %v199 = vld [vmem:[%s1 + $0x8] sm:$0xff]
    %v200 = vld [vmem:[%s1 + $0x10] sm:$0xff]
    %v201 = vld [vmem:[%s1 + $0x18] sm:$0xff]
    %v202 = vld [vmem:[%s1 + $0x20] sm:$0xff]
    %v203 = vld [vmem:[%s1 + $0x28] sm:$0xff]
    %v204 = vld [vmem:[%s1 + $0x30] sm:$0xff]
    %v205 = vld [vmem:[%s1 + $0x38] sm:$0xff]
    %v206 = vld [vmem:[%s1 + $0x40] sm:$0xff]
    %v207 = vld [vmem:[%s1 + $0x48] sm:$0xff]
    %v208 = vld [vmem:[%s1 + $0x50] sm:$0xff]
    %v209 = vld [vmem:[%s1 + $0x58] sm:$0xff]
    %v210 = vld [vmem:[%s1 + $0x60] sm:$0xff]
    %v211 = vld [vmem:[%s1 + $0x68] sm:$0xff]
    %v212 = vld [vmem:[%s1 + $0x70] sm:$0xff]
    %v213 = vld [vmem:[%s1 + $0x78] sm:$0xff]
    %v214 = vld [vmem:[%s1 + $0x80] sm:$0xff]
    %v215 = vld [vmem:[%s1 + $0x88] sm:$0xff]
    %v216 = vld [vmem:[%s1 + $0x90] sm:$0xff]
    %v217 = vld [vmem:[%s1 + $0x98] sm:$0xff]
    %v218 = vld [vmem:[%s1 + $0xa0] sm:$0xff]
    %v219 = vld [vmem:[%s1 + $0xa8] sm:$0xff]
    %v220 = vld [vmem:[%s1 + $0xb0] sm:$0xff]
    %v221 = vld [vmem:[%s1 + $0xb8] sm:$0xff]
    %v222 = vld [vmem:[%s1 + $0xc0] sm:$0xff]
    %v223 = vld [vmem:[%s1 + $0xc8] sm:$0xff]
    %v224 = vld [vmem:[%s1 + $0xd0] sm:$0xff]
    %v225 = vld [vmem:[%s1 + $0xd8] sm:$0xff]
    %v226 = vld [vmem:[%s1 + $0xe0] sm:$0xff]
    %v227 = vld [vmem:[%s1 + $0xe8] sm:$0xff]
    %v228 = vld [vmem:[%s1 + $0xf0] sm:$0xff]
    %v229 = vld [vmem:[%s1 + $0xf8] sm:$0xff]
    %v230 = vld [vmem:[%s1 + $0x100] sm:$0xff]
    %v231 = vld [vmem:[%s1 + $0x108] sm:$0xff]
    %v232 = vld [vmem:[%s1 + $0x110] sm:$0xff]
    %v233 = vld [vmem:[%s1 + $0x118] sm:$0xff]
    %v234 = vld [vmem:[%s1 + $0x120] sm:$0xff]
    %v235 = vld [vmem:[%s1 + $0x128] sm:$0xff]
    %v236 = vld [vmem:[%s1 + $0x130] sm:$0xff]
    %v237 = vld [vmem:[%s1 + $0x138] sm:$0xff]
    %v238 = vld [vmem:[%s1 + $0x140] sm:$0xff]
    %v239 = vld [vmem:[%s1 + $0x148] sm:$0xff]
    %v240 = vld [vmem:[%s1 + $0x150] sm:$0xff]
    %v241 = vld [vmem:[%s1 + $0x158] sm:$0xff]
    %v242 = vld [vmem:[%s1 + $0x160] sm:$0xff]
    %v243 = vld [vmem:[%s1 + $0x168] sm:$0xff]
    %v244 = vld [vmem:[%s1 + $0x170] sm:$0xff]
    %v245 = vld [vmem:[%s1 + $0x178] sm:$0xff]
    %v246 = vld [vmem:[%s1 + $0x180] sm:$0xff]
    %v247 = vld [vmem:[%s1 + $0x188] sm:$0xff]
    %v248 = vld [vmem:[%s1 + $0x190] sm:$0xff]
    %v249 = vld [vmem:[%s1 + $0x198] sm:$0xff]
    %v250 = vld [vmem:[%s1 + $0x1a0] sm:$0xff]
    %v251 = vld [vmem:[%s1 + $0x1a8] sm:$0xff]
    %v252 = vld [vmem:[%s1 + $0x1b0] sm:$0xff]
    %v253 = vld [vmem:[%s1 + $0x1b8] sm:$0xff]
    %v254 = vld [vmem:[%s1 + $0x1c0] sm:$0xff]
    %v255 = vld [vmem:[%s1 + $0x1c8] sm:$0xff]
    %v256 = vld [vmem:[%s1 + $0x1d0] sm:$0xff]
    %v257 = vld [vmem:[%s1 + $0x1d8] sm:$0xff]
    %v258 = vld [vmem:[%s2] sm:$0x7]
    %v260 = vlaneseq
    %v261 = vshrl.u32 %v260, 7
    %v262 = vsub.s32 0, %v261
    %v263 = vrot.slane %v258, %v262
    %v264 = vlaneseq
    %v265 = vshrl.u32 %v264, 7
    %v266 = vsub.s32 1, %v265
    %v267 = vrot.slane %v258, %v266
    %v268 = vlaneseq
    %v269 = vshrl.u32 %v268, 7
    %v270 = vsub.s32 2, %v269
    %v271 = vrot.slane %v258, %v270
    %v275 = vsel %vm45, %v178, 0
    %v277 = vsel %vm45, %v180, 0
    %v279 = vsel %vm45, %v183, 0
    %v281 = vsel %vm45, %v184, 0
    %283 = vmatprep.subr.mxu0 %v199
    %284 = vmatpush1.msra.mxu0 %v198
    %285 = vmatprep.subr.mxu0 %v202
    %286 = vmatpush1.msra.mxu0 %v201
    %287 = vmatprep.subr.mxu0 %v205
    %288 = vmatpush1.msra.mxu0 %v204
    %289 = vmatprep.subr.mxu0 %v208
    %290 = vmatpush1.msra.mxu0 %v207
    %291 = vmatprep.subr.mxu0 %v211
    %292 = vmatpush1.msra.mxu0 %v210
    %293 = vmatprep.subr.mxu0 %v214
    %294 = vmatpush1.msra.mxu0 %v213
    %295 = vmatprep.subr.mxu0 %v217
    %296 = vmatpush1.msra.mxu0 %v216
    %297 = vmatprep.subr.mxu0 %v220
    %298 = vmatpush1.msra.mxu0 %v219
    %299 = vmatprep.subr.mxu0 %v223
    %300 = vmatpush1.msra.mxu0 %v222
    %301 = vmatprep.subr.mxu0 %v226
    %302 = vmatpush1.msra.mxu0 %v225
    %303 = vmatprep.subr.mxu0 %v229
    %304 = vmatpush1.msra.mxu0 %v228
    %305 = vmatprep.subr.mxu0 %v232
    %306 = vmatpush1.msra.mxu0 %v231
    %307 = vmatprep.subr.mxu0 %v235
    %308 = vmatpush1.msra.mxu0 %v234
    %309 = vmatprep.subr.mxu0 %v238
    %310 = vmatpush1.msra.mxu0 %v237
    %311 = vmatprep.subr.mxu0 %v241
    %312 = vmatpush1.msra.mxu0 %v240
    %313 = vmatprep.subr.mxu0 %v244
    %314 = vmatpush1.msra.mxu0 %v243
    %315 = vmatprep.subr.mxu0 %v247
    %316 = vmatpush1.msra.mxu0 %v246
    %317 = vmatprep.subr.mxu0 %v250
    %318 = vmatpush1.msra.mxu0 %v249
    %319 = vmatprep.subr.mxu0 %v253
    %320 = vmatpush1.msra.mxu0 %v252
    %321 = vmatprep.subr.mxu0 %v256
    %322 = vmatpush1.msra.mxu0 %v255
    %323 = vmatprep.subr.mxu0 0.0
    %324 = vmatpush1.msra.mxu0 0.0
    %325 = vmatprep.subr.mxu0 0.0
    %326 = vmatpush1.msra.mxu0 0.0
    %327 = vmatprep.subr.mxu0 0.0
    %328 = vmatpush1.msra.mxu0 0.0
    %329 = vmatprep.subr.mxu0 0.0
    %330 = vmatpush1.msra.mxu0 0.0
    %331 = vmatprep.subr.mxu0 0.0
    %332 = vmatpush1.msra.mxu0 0.0
    %333 = vmatprep.subr.mxu0 0.0
    %334 = vmatpush1.msra.mxu0 0.0
    %335 = vmatprep.subr.mxu0 0.0
    %336 = vmatpush1.msra.mxu0 0.0
    %337 = vmatprep.subr.mxu0 0.0
    %338 = vmatpush1.msra.mxu0 0.0
    %339 = vmatprep.subr.mxu0 0.0
    %340 = vmatpush1.msra.mxu0 0.0
    %341 = vmatprep.subr.mxu0 0.0
    %342 = vmatpush1.msra.mxu0 0.0
    %343 = vmatprep.subr.mxu0 0.0
    %344 = vmatpush1.msra.mxu0 0.0
    %345 = vmatprep.subr.mxu0 0.0
    %346 = vmatpush1.msra.mxu0 0.0
    %347 = vmatprep.mubr.f32.mxu0 %v275
    %348 = vmatmul.mubr.f32.gmra.mrb[0].mxu0 %v194
    %v349 = vpop.f32.mrb[0].mxu0
    %v350 = vadd.f32 %v263, %v349
    %v351 = vpop.f32.mrb[0].mxu0
    %v352 = vadd.f32 %v267, %v351
    %353 = vmatprep.mubr.f32.mxu0 %v277
    %354 = vmatmul.mubr.f32.gmra.mrb[0].mxu0 %v195
    %v355 = vpop.f32.mrb[0].mxu0
    %v356 = vadd.f32 %v263, %v355
    %v357 = vpop.f32.mrb[0].mxu0
    %v358 = vadd.f32 %v267, %v357
    %359 = vmatprep.mubr.f32.mxu0 %v279
    %360 = vmatmul.mubr.f32.gmra.mrb[0].mxu0 %v196
    %v361 = vpop.f32.mrb[0].mxu0
    %v362 = vadd.f32 %v263, %v361
    %v363 = vpop.f32.mrb[0].mxu0
    %v364 = vadd.f32 %v267, %v363
    %365 = vmatprep.mubr.f32.mxu0 %v281
    %366 = vmatmul.mubr.f32.gmra.mrb[0].mxu0 %v197
    %v367 = vpop.f32.mrb[0].mxu0
    %v368 = vadd.f32 %v263, %v367
    %v369 = vpop.f32.mrb[0].mxu0
    %v370 = vadd.f32 %v267, %v369
    %371 = vdwg.mxu0
    %372 = vmatprep.subr.mxu0 0.0
    %373 = vmatpush1.msra.mxu0 %v200
    %374 = vmatprep.subr.mxu0 0.0
    %375 = vmatpush1.msra.mxu0 %v203
    %376 = vmatprep.subr.mxu0 0.0
    %377 = vmatpush1.msra.mxu0 %v206
    %378 = vmatprep.subr.mxu0 0.0
    %379 = vmatpush1.msra.mxu0 %v209
    %380 = vmatprep.subr.mxu0 0.0
    %381 = vmatpush1.msra.mxu0 %v212
    %382 = vmatprep.subr.mxu0 0.0
    %383 = vmatpush1.msra.mxu0 %v215
    %384 = vmatprep.subr.mxu0 0.0
    %385 = vmatpush1.msra.mxu0 %v218
    %386 = vmatprep.subr.mxu0 0.0
    %387 = vmatpush1.msra.mxu0 %v221
    %388 = vmatprep.subr.mxu0 0.0
    %389 = vmatpush1.msra.mxu0 %v224
    %390 = vmatprep.subr.mxu0 0.0
    %391 = vmatpush1.msra.mxu0 %v227
    %392 = vmatprep.subr.mxu0 0.0
    %393 = vmatpush1.msra.mxu0 %v230
    %394 = vmatprep.subr.mxu0 0.0
    %395 = vmatpush1.msra.mxu0 %v233
    %396 = vmatprep.subr.mxu0 0.0
    %397 = vmatpush1.msra.mxu0 %v236
    %398 = vmatprep.subr.mxu0 0.0
    %399 = vmatpush1.msra.mxu0 %v239
    %400 = vmatprep.subr.mxu0 0.0
    %401 = vmatpush1.msra.mxu0 %v242
    %402 = vmatprep.subr.mxu0 0.0
    %403 = vmatpush1.msra.mxu0 %v245
    %404 = vmatprep.subr.mxu0 0.0
    %405 = vmatpush1.msra.mxu0 %v248
    %406 = vmatprep.subr.mxu0 0.0
    %407 = vmatpush1.msra.mxu0 %v251
    %408 = vmatprep.subr.mxu0 0.0
    %409 = vmatpush1.msra.mxu0 %v254
    %410 = vmatprep.subr.mxu0 0.0
    %411 = vmatpush1.msra.mxu0 %v257
    %412 = vmatprep.subr.mxu0 0.0
    %413 = vmatpush1.msra.mxu0 0.0
    %414 = vmatprep.subr.mxu0 0.0
    %415 = vmatpush1.msra.mxu0 0.0
    %416 = vmatprep.subr.mxu0 0.0
    %417 = vmatpush1.msra.mxu0 0.0
    %418 = vmatprep.subr.mxu0 0.0
    %419 = vmatpush1.msra.mxu0 0.0
    %420 = vmatprep.subr.mxu0 0.0
    %421 = vmatpush1.msra.mxu0 0.0
    %422 = vmatprep.subr.mxu0 0.0
    %423 = vmatpush1.msra.mxu0 0.0
    %424 = vmatprep.subr.mxu0 0.0
    %425 = vmatpush1.msra.mxu0 0.0
    %426 = vmatprep.subr.mxu0 0.0
    %427 = vmatpush1.msra.mxu0 0.0
    %428 = vmatprep.subr.mxu0 0.0
    %429 = vmatpush1.msra.mxu0 0.0
    %430 = vmatprep.subr.mxu0 0.0
    %431 = vmatpush1.msra.mxu0 0.0
    %432 = vmatprep.subr.mxu0 0.0
    %433 = vmatpush1.msra.mxu0 0.0
    %434 = vmatprep.subr.mxu0 0.0
    %435 = vmatpush1.msra.mxu0 0.0
    %436 = vmatprep.mubr.f32.mxu0 %v275
    %437 = vmatmul.mubr.f32.gmra.mrb[0].mxu0 %v194
    %v438 = vpop.f32.mrb[0].mxu0
    %v439 = vadd.f32 %v271, %v438
    %v440 = vpop.f32.mrb[0].mxu0
    %441 = vmatprep.mubr.f32.mxu0 %v277
    %442 = vmatmul.mubr.f32.gmra.mrb[0].mxu0 %v195
    %v443 = vpop.f32.mrb[0].mxu0
    %v444 = vadd.f32 %v271, %v443
    %v445 = vpop.f32.mrb[0].mxu0
    %446 = vmatprep.mubr.f32.mxu0 %v279
    %447 = vmatmul.mubr.f32.gmra.mrb[0].mxu0 %v196
    %v448 = vpop.f32.mrb[0].mxu0
    %v449 = vadd.f32 %v271, %v448
    %v450 = vpop.f32.mrb[0].mxu0
    %451 = vmatprep.mubr.f32.mxu0 %v281
    %452 = vmatmul.mubr.f32.gmra.mrb[0].mxu0 %v197
    %v453 = vpop.f32.mrb[0].mxu0
    %v454 = vadd.f32 %v271, %v453
    %v455 = vpop.f32.mrb[0].mxu0
    %456 = vdwg.mxu0
    %v457 = vmax.f32 %v350, 0.0
    %v458 = vmax.f32 %v352, 0.0
    %v459 = vmax.f32 %v439, 0.0
    %v460 = vmax.f32 %v356, 0.0
    %v461 = vmax.f32 %v358, 0.0
    %v462 = vmax.f32 %v444, 0.0
    %v463 = vmax.f32 %v362, 0.0
    %v464 = vmax.f32 %v364, 0.0
    %v465 = vmax.f32 %v449, 0.0
    %v466 = vmax.f32 %v368, 0.0
    %v467 = vmax.f32 %v370, 0.0
    %v468 = vmax.f32 %v454, 0.0
    %v469 = vlaneseq
    %v470 = vshrl.u32 %v469, 7
    %v471 = vadd.s32 %v470, 8
    %vm472 = vcmp.lt.s32.totalorder %v470, 14
    %vm473 = vcmp.lt.s32.totalorder %v471, 14
    %v474 = vsel %vm472, 1, 0
    %v475 = vsel %vm473, 1, 0
    %vm476 = vcmp.eq.s32.totalorder %v474, 1
    %vm477 = vcmp.eq.s32.totalorder %v475, 1
    %v478 = vsel %vm476, %v457, 0.0
    %v479 = vsel %vm477, %v460, 0.0
    %v480 = vsel %vm476, %v463, 0.0
    %v481 = vsel %vm477, %v466, 0.0
    %v482 = vmax.f32 %v478, %v479
    %v483 = vrot.slane %v482, 4
    %v484 = vmax.f32 %v482, %v483
    %v485 = vrot.slane %v484, 2
    %v486 = vmax.f32 %v484, %v485
    %v487 = vrot.slane %v486, 1
    %v488 = vmax.f32 %v486, %v487
    %v489 = vmax.f32 %v480, %v481
    %v490 = vrot.slane %v489, 4
    %v491 = vmax.f32 %v489, %v490
    %v492 = vrot.slane %v491, 2
    %v493 = vmax.f32 %v491, %v492
    %v494 = vrot.slane %v493, 1
    %v495 = vmax.f32 %v493, %v494
    %vm496 = vcmp.lt.s32.totalorder %v470, 13
    %vm497 = vcmp.lt.s32.totalorder %v471, 13
    %v498 = vsel %vm496, 1, 0
    %v499 = vsel %vm497, 1, 0
    %vm500 = vcmp.eq.s32.totalorder %v498, 1
    %vm501 = vcmp.eq.s32.totalorder %v499, 1
    %v502 = vsel %vm500, %v458, 0.0
    %v503 = vsel %vm501, %v461, 0.0
    %v504 = vsel %vm500, %v464, 0.0
    %v505 = vsel %vm501, %v467, 0.0
    %v506 = vmax.f32 %v502, %v503
    %v507 = vrot.slane %v506, 4
    %v508 = vmax.f32 %v506, %v507
    %v509 = vrot.slane %v508, 2
    %v510 = vmax.f32 %v508, %v509
    %v511 = vrot.slane %v510, 1
    %v512 = vmax.f32 %v510, %v511
    %v513 = vmax.f32 %v504, %v505
    %v514 = vrot.slane %v513, 4
    %v515 = vmax.f32 %v513, %v514
    %v516 = vrot.slane %v515, 2
    %v517 = vmax.f32 %v515, %v516
    %v518 = vrot.slane %v517, 1
    %v519 = vmax.f32 %v517, %v518
    %vm520 = vcmp.lt.s32.totalorder %v470, 12
    %vm521 = vcmp.lt.s32.totalorder %v471, 12
    %v522 = vsel %vm520, 1, 0
    %v523 = vsel %vm521, 1, 0
    %vm524 = vcmp.eq.s32.totalorder %v522, 1
    %vm525 = vcmp.eq.s32.totalorder %v523, 1
    %v526 = vsel %vm524, %v459, 0.0
    %v527 = vsel %vm525, %v462, 0.0
    %v528 = vsel %vm524, %v465, 0.0
    %v529 = vsel %vm525, %v468, 0.0
    %v530 = vmax.f32 %v526, %v527
    %v531 = vrot.slane %v530, 4
    %v532 = vmax.f32 %v530, %v531
    %v533 = vrot.slane %v532, 2
    %v534 = vmax.f32 %v532, %v533
    %v535 = vrot.slane %v534, 1
    %v536 = vmax.f32 %v534, %v535
    %v537 = vmax.f32 %v528, %v529
    %v538 = vrot.slane %v537, 4
    %v539 = vmax.f32 %v537, %v538
    %v540 = vrot.slane %v539, 2
    %v541 = vmax.f32 %v539, %v540
    %v542 = vrot.slane %v541, 1
    %v543 = vmax.f32 %v541, %v542
    %v546 = vsel %vm88, %v495, %v488
    %v550 = vsel %vm88, %v519, %v512
    %v554 = vsel %vm88, %v543, %v536
    %v556 = vld [vmem:[%s3] sm:$0xff]
    %v557 = vld [vmem:[%s3 + $0x8] sm:$0xff]
    %v558 = vld [vmem:[%s3 + $0x10] sm:$0xff]
    %v559 = vld [vmem:[%s3 + $0x18] sm:$0xff]
    %v560 = vld [vmem:[%s3 + $0x20] sm:$0xff]
    %v561 = vld [vmem:[%s3 + $0x28] sm:$0xff]
    %v562 = vld [vmem:[%s3 + $0x30] sm:$0xff]
    %v563 = vld [vmem:[%s3 + $0x38] sm:$0xff]
    %v564 = vld [vmem:[%s3 + $0x40] sm:$0xff]
    %v565 = vld [vmem:[%s3 + $0x48] sm:$0xff]
    %v566 = vld [vmem:[%s3 + $0x50] sm:$0xff]
    %v567 = vld [vmem:[%s3 + $0x58] sm:$0xff]
    %v568 = vld [vmem:[%s3 + $0x60] sm:$0xff]
    %v569 = vld [vmem:[%s3 + $0x68] sm:$0xff]
    %v570 = vld [vmem:[%s3 + $0x70] sm:$0xff]
    %v571 = vld [vmem:[%s3 + $0x78] sm:$0xff]
    %v572 = vld [vmem:[%s3 + $0x80] sm:$0xff]
    %v573 = vld [vmem:[%s3 + $0x88] sm:$0xff]
    %v574 = vld [vmem:[%s3 + $0x90] sm:$0xff]
    %v575 = vld [vmem:[%s3 + $0x98] sm:$0xff]
    %v576 = vld [vmem:[%s3 + $0xa0] sm:$0xff]
    %v577 = vld [vmem:[%s3 + $0xa8] sm:$0xff]
    %v578 = vld [vmem:[%s3 + $0xb0] sm:$0xff]
    %v579 = vld [vmem:[%s3 + $0xb8] sm:$0xff]
    %v580 = vld [vmem:[%s3 + $0xc0] sm:$0xff]
    %v581 = vld [vmem:[%s3 + $0xc8] sm:$0xff]
    %v582 = vld [vmem:[%s3 + $0xd0] sm:$0xff]
    %v583 = vld [vmem:[%s3 + $0xd8] sm:$0xff]
    %v584 = vld [vmem:[%s3 + $0xe0] sm:$0xff]
    %v585 = vld [vmem:[%s3 + $0xe8] sm:$0xff]
    %v586 = vld [vmem:[%s3 + $0xf0] sm:$0xff]
    %v587 = vld [vmem:[%s3 + $0xf8] sm:$0xff]
    %v588 = vld [vmem:[%s3 + $0x100] sm:$0xff]
    %v589 = vld [vmem:[%s3 + $0x108] sm:$0xff]
    %v590 = vld [vmem:[%s3 + $0x110] sm:$0xff]
    %v591 = vld [vmem:[%s3 + $0x118] sm:$0xff]
    %v592 = vld [vmem:[%s3 + $0x120] sm:$0xff]
    %v593 = vld [vmem:[%s3 + $0x128] sm:$0xff]
    %v594 = vld [vmem:[%s3 + $0x130] sm:$0xff]
    %v595 = vld [vmem:[%s3 + $0x138] sm:$0xff]
    %v596 = vld [vmem:[%s3 + $0x140] sm:$0xff]
    %v597 = vld [vmem:[%s3 + $0x148] sm:$0xff]
    %v598 = vld [vmem:[%s3 + $0x150] sm:$0xff]
    %v599 = vld [vmem:[%s3 + $0x158] sm:$0xff]
    %v600 = vld [vmem:[%s3 + $0x160] sm:$0xff]
    %v601 = vld [vmem:[%s3 + $0x168] sm:$0xff]
    %v602 = vld [vmem:[%s3 + $0x170] sm:$0xff]
    %v603 = vld [vmem:[%s3 + $0x178] sm:$0xff]
    %v604 = vld [vmem:[%s4] sm:$0x1]
    %v606 = vlaneseq
    %v607 = vshrl.u32 %v606, 7
    %v608 = vsub.s32 0, %v607
    %v609 = vrot.slane %v604, %v608
    %611 = vmatprep.subr.mxu0 0.0
    %612 = vmatpush1.msra.mxu0 %v556
    %613 = vmatprep.subr.mxu0 0.0
    %614 = vmatpush1.msra.mxu0 %v557
    %615 = vmatprep.subr.mxu0 0.0
    %616 = vmatpush1.msra.mxu0 %v558
    %617 = vmatprep.subr.mxu0 0.0
    %618 = vmatpush1.msra.mxu0 %v559
    %619 = vmatprep.subr.mxu0 0.0
    %620 = vmatpush1.msra.mxu0 %v560
    %621 = vmatprep.subr.mxu0 0.0
    %622 = vmatpush1.msra.mxu0 %v561
    %623 = vmatprep.subr.mxu0 0.0
    %624 = vmatpush1.msra.mxu0 %v562
    %625 = vmatprep.subr.mxu0 0.0
    %626 = vmatpush1.msra.mxu0 %v563
    %627 = vmatprep.subr.mxu0 0.0
    %628 = vmatpush1.msra.mxu0 %v564
    %629 = vmatprep.subr.mxu0 0.0
    %630 = vmatpush1.msra.mxu0 %v565
    %631 = vmatprep.subr.mxu0 0.0
    %632 = vmatpush1.msra.mxu0 %v566
    %633 = vmatprep.subr.mxu0 0.0
    %634 = vmatpush1.msra.mxu0 %v567
    %635 = vmatprep.subr.mxu0 0.0
    %636 = vmatpush1.msra.mxu0 %v568
    %637 = vmatprep.subr.mxu0 0.0
    %638 = vmatpush1.msra.mxu0 %v569
    %639 = vmatprep.subr.mxu0 0.0
    %640 = vmatpush1.msra.mxu0 %v570
    %641 = vmatprep.subr.mxu0 0.0
    %642 = vmatpush1.msra.mxu0 %v571
    %643 = vmatprep.subr.mxu0 0.0
    %644 = vmatpush1.msra.mxu0 %v572
    %645 = vmatprep.subr.mxu0 0.0
    %646 = vmatpush1.msra.mxu0 %v573
    %647 = vmatprep.subr.mxu0 0.0
    %648 = vmatpush1.msra.mxu0 %v574
    %649 = vmatprep.subr.mxu0 0.0
    %650 = vmatpush1.msra.mxu0 %v575
    %651 = vmatprep.subr.mxu0 0.0
    %652 = vmatpush1.msra.mxu0 %v576
    %653 = vmatprep.subr.mxu0 0.0
    %654 = vmatpush1.msra.mxu0 %v577
    %655 = vmatprep.subr.mxu0 0.0
    %656 = vmatpush1.msra.mxu0 %v578
    %657 = vmatprep.subr.mxu0 0.0
    %658 = vmatpush1.msra.mxu0 %v579
    %659 = vmatprep.subr.mxu0 0.0
    %660 = vmatpush1.msra.mxu0 %v580
    %661 = vmatprep.subr.mxu0 0.0
    %662 = vmatpush1.msra.mxu0 %v581
    %663 = vmatprep.subr.mxu0 0.0
    %664 = vmatpush1.msra.mxu0 %v582
    %665 = vmatprep.subr.mxu0 0.0
    %666 = vmatpush1.msra.mxu0 %v583
    %667 = vmatprep.subr.mxu0 0.0
    %668 = vmatpush1.msra.mxu0 %v584
    %669 = vmatprep.subr.mxu0 0.0
    %670 = vmatpush1.msra.mxu0 %v585
    %671 = vmatprep.subr.mxu0 0.0
    %672 = vmatpush1.msra.mxu0 %v586
    %673 = vmatprep.subr.mxu0 0.0
    %674 = vmatpush1.msra.mxu0 %v587
    %675 = vmatprep.mubr.f32.mxu0 %v550
    %676 = vmatmul.mubr.f32.gmra.mrb[0].mxu0 %v546
    %v677 = vpop.f32.mrb[0].mxu0
    %v678 = vadd.f32 %v609, %v677
    %v679 = vpop.f32.mrb[0].mxu0
    %680 = vdwg.mxu0
    %681 = vmatprep.subr.mxu0 0.0
    %682 = vmatpush1.msra.mxu0 %v588
    %683 = vmatprep.subr.mxu0 0.0
    %684 = vmatpush1.msra.mxu0 %v589
    %685 = vmatprep.subr.mxu0 0.0
    %686 = vmatpush1.msra.mxu0 %v590
    %687 = vmatprep.subr.mxu0 0.0
    %688 = vmatpush1.msra.mxu0 %v591
    %689 = vmatprep.subr.mxu0 0.0
    %690 = vmatpush1.msra.mxu0 %v592
    %691 = vmatprep.subr.mxu0 0.0
    %692 = vmatpush1.msra.mxu0 %v593
    %693 = vmatprep.subr.mxu0 0.0
    %694 = vmatpush1.msra.mxu0 %v594
    %695 = vmatprep.subr.mxu0 0.0
    %696 = vmatpush1.msra.mxu0 %v595
    %697 = vmatprep.subr.mxu0 0.0
    %698 = vmatpush1.msra.mxu0 %v596
    %699 = vmatprep.subr.mxu0 0.0
    %700 = vmatpush1.msra.mxu0 %v597
    %701 = vmatprep.subr.mxu0 0.0
    %702 = vmatpush1.msra.mxu0 %v598
    %703 = vmatprep.subr.mxu0 0.0
    %704 = vmatpush1.msra.mxu0 %v599
    %705 = vmatprep.subr.mxu0 0.0
    %706 = vmatpush1.msra.mxu0 %v600
    %707 = vmatprep.subr.mxu0 0.0
    %708 = vmatpush1.msra.mxu0 %v601
    %709 = vmatprep.subr.mxu0 0.0
    %710 = vmatpush1.msra.mxu0 %v602
    %711 = vmatprep.subr.mxu0 0.0
    %712 = vmatpush1.msra.mxu0 %v603
    %713 = vmatprep.subr.mxu0 0.0
    %714 = vmatpush1.msra.mxu0 0.0
    %715 = vmatprep.subr.mxu0 0.0
    %716 = vmatpush1.msra.mxu0 0.0
    %717 = vmatprep.subr.mxu0 0.0
    %718 = vmatpush1.msra.mxu0 0.0
    %719 = vmatprep.subr.mxu0 0.0
    %720 = vmatpush1.msra.mxu0 0.0
    %721 = vmatprep.subr.mxu0 0.0
    %722 = vmatpush1.msra.mxu0 0.0
    %723 = vmatprep.subr.mxu0 0.0
    %724 = vmatpush1.msra.mxu0 0.0
    %725 = vmatprep.subr.mxu0 0.0
    %726 = vmatpush1.msra.mxu0 0.0
    %727 = vmatprep.subr.mxu0 0.0
    %728 = vmatpush1.msra.mxu0 0.0
    %729 = vmatprep.subr.mxu0 0.0
    %730 = vmatpush1.msra.mxu0 0.0
    %731 = vmatprep.subr.mxu0 0.0
    %732 = vmatpush1.msra.mxu0 0.0
    %733 = vmatprep.subr.mxu0 0.0
    %734 = vmatpush1.msra.mxu0 0.0
    %735 = vmatprep.subr.mxu0 0.0
    %736 = vmatpush1.msra.mxu0 0.0
    %737 = vmatprep.subr.mxu0 0.0
    %738 = vmatpush1.msra.mxu0 0.0
    %739 = vmatprep.subr.mxu0 0.0
    %740 = vmatpush1.msra.mxu0 0.0
    %741 = vmatprep.subr.mxu0 0.0
    %742 = vmatpush1.msra.mxu0 0.0
    %743 = vmatprep.subr.mxu0 0.0
    %744 = vmatpush1.msra.mxu0 0.0
    %745 = vmatprep.mubr.f32.mxu0 0.0
    %746 = vmatmul.mubr.f32.gmra.mrb[0].mxu0 %v554
    %v747 = vpop.f32.mrb[0].mxu0
    %v748 = vadd.f32 %v678, %v747
    %v749 = vpop.f32.mrb[0].mxu0
    %750 = vdwg.mxu0
    %v751 = vmax.f32 %v748, 0.0
    %v752 = vld [vmem:[#allocation2] sm:$0xff]
    %v753 = vld [vmem:[#allocation2 + $0x8] sm:$0xff]
    %v754 = vld [vmem:[#allocation2 + $0x10] sm:$0xff]
    %v755 = vld [vmem:[#allocation2 + $0x18] sm:$0xff]
    %v756 = vld [vmem:[#allocation2 + $0x20] sm:$0xff]
    %v757 = vld [vmem:[#allocation2 + $0x28] sm:$0xff]
    %v758 = vld [vmem:[#allocation2 + $0x30] sm:$0xff]
    %v759 = vld [vmem:[#allocation2 + $0x38] sm:$0xff]
    %v760 = vld [vmem:[#allocation2 + $0x40] sm:$0xff]
    %v761 = vld [vmem:[#allocation2 + $0x48] sm:$0xff]
    %v762 = vld [vmem:[#allocation2 + $0x50] sm:$0xff]
    %v763 = vld [vmem:[#allocation2 + $0x58] sm:$0xff]
    %v764 = vld [vmem:[#allocation2 + $0x60] sm:$0xff]
    %v765 = vld [vmem:[#allocation2 + $0x68] sm:$0xff]
    %v766 = vld [vmem:[#allocation2 + $0x70] sm:$0xff]
    %v767 = vld [vmem:[#allocation2 + $0x78] sm:$0xff]
    %v768 = vld [vmem:[#allocation2 + $0x80] sm:$0xff]
    %v769 = vld [vmem:[#allocation2 + $0x88] sm:$0xff]
    %v770 = vld [vmem:[%s6] sm:$0x7]
    %v772 = vlaneseq
    %v773 = vshrl.u32 %v772, 7
    %v774 = vsub.s32 0, %v773
    %v775 = vrot.slane %v770, %v774
    %v776 = vlaneseq
    %v777 = vshrl.u32 %v776, 7
    %v778 = vsub.s32 1, %v777
    %v779 = vrot.slane %v770, %v778
    %v780 = vlaneseq
    %v781 = vshrl.u32 %v780, 7
    %v782 = vsub.s32 2, %v781
    %v783 = vrot.slane %v770, %v782
    %vm787 = vcmask 392192
    %v789 = vsel %vm787, %v751, 0
    %791 = vmatprep.subr.mxu0 %v753
    %792 = vmatpush1.msra.mxu0 %v752
    %793 = vmatprep.subr.mxu0 %v756
    %794 = vmatpush1.msra.mxu0 %v755
    %795 = vmatprep.subr.mxu0 %v759
    %796 = vmatpush1.msra.mxu0 %v758
    %797 = vmatprep.subr.mxu0 %v762
    %798 = vmatpush1.msra.mxu0 %v761
    %799 = vmatprep.subr.mxu0 %v765
    %800 = vmatpush1.msra.mxu0 %v764
    %801 = vmatprep.subr.mxu0 %v768
    %802 = vmatpush1.msra.mxu0 %v767
    %803 = vmatprep.subr.mxu0 0.0
    %804 = vmatpush1.msra.mxu0 0.0
    %805 = vmatprep.subr.mxu0 0.0
    %806 = vmatpush1.msra.mxu0 0.0
    %807 = vmatprep.subr.mxu0 0.0
    %808 = vmatpush1.msra.mxu0 0.0
    %809 = vmatprep.subr.mxu0 0.0
    %810 = vmatpush1.msra.mxu0 0.0
    %811 = vmatprep.subr.mxu0 0.0
    %812 = vmatpush1.msra.mxu0 0.0
    %813 = vmatprep.subr.mxu0 0.0
    %814 = vmatpush1.msra.mxu0 0.0
    %815 = vmatprep.subr.mxu0 0.0
    %816 = vmatpush1.msra.mxu0 0.0
    %817 = vmatprep.subr.mxu0 0.0
    %818 = vmatpush1.msra.mxu0 0.0
    %819 = vmatprep.subr.mxu0 0.0
    %820 = vmatpush1.msra.mxu0 0.0
    %821 = vmatprep.subr.mxu0 0.0
    %822 = vmatpush1.msra.mxu0 0.0
    %823 = vmatprep.subr.mxu0 0.0
    %824 = vmatpush1.msra.mxu0 0.0
    %825 = vmatprep.subr.mxu0 0.0
    %826 = vmatpush1.msra.mxu0 0.0
    %827 = vmatprep.subr.mxu0 0.0
    %828 = vmatpush1.msra.mxu0 0.0
    %829 = vmatprep.subr.mxu0 0.0
    %830 = vmatpush1.msra.mxu0 0.0
    %831 = vmatprep.subr.mxu0 0.0
    %832 = vmatpush1.msra.mxu0 0.0
    %833 = vmatprep.subr.mxu0 0.0
    %834 = vmatpush1.msra.mxu0 0.0
    %835 = vmatprep.subr.mxu0 0.0
    %836 = vmatpush1.msra.mxu0 0.0
    %837 = vmatprep.subr.mxu0 0.0
    %838 = vmatpush1.msra.mxu0 0.0
    %839 = vmatprep.subr.mxu0 0.0
    %840 = vmatpush1.msra.mxu0 0.0
    %841 = vmatprep.subr.mxu0 0.0
    %842 = vmatpush1.msra.mxu0 0.0
    %843 = vmatprep.subr.mxu0 0.0
    %844 = vmatpush1.msra.mxu0 0.0
    %845 = vmatprep.subr.mxu0 0.0
    %846 = vmatpush1.msra.mxu0 0.0
    %847 = vmatprep.subr.mxu0 0.0
    %848 = vmatpush1.msra.mxu0 0.0
    %849 = vmatprep.subr.mxu0 0.0
    %850 = vmatpush1.msra.mxu0 0.0
    %851 = vmatprep.subr.mxu0 0.0
    %852 = vmatpush1.msra.mxu0 0.0
    %853 = vmatprep.subr.mxu0 0.0
    %854 = vmatpush1.msra.mxu0 0.0
    %855 = vmatprep.mubr.f32.mxu0 0.0
    %856 = vmatmul.mubr.f32.gmra.mrb[0].mxu0 %v789
    %v857 = vpop.f32.mrb[0].mxu0
    %v858 = vadd.f32 %v775, %v857
    %v859 = vpop.f32.mrb[0].mxu0
    %v860 = vadd.f32 %v779, %v859
    %861 = vdwg.mxu0
    %862 = vmatprep.subr.mxu0 0.0
    %863 = vmatpush1.msra.mxu0 %v754
    %864 = vmatprep.subr.mxu0 0.0
    %865 = vmatpush1.msra.mxu0 %v757
    %866 = vmatprep.subr.mxu0 0.0
    %867 = vmatpush1.msra.mxu0 %v760
    %868 = vmatprep.subr.mxu0 0.0
    %869 = vmatpush1.msra.mxu0 %v763
    %870 = vmatprep.subr.mxu0 0.0
    %871 = vmatpush1.msra.mxu0 %v766
    %872 = vmatprep.subr.mxu0 0.0
    %873 = vmatpush1.msra.mxu0 %v769
    %874 = vmatprep.subr.mxu0 0.0
    %875 = vmatpush1.msra.mxu0 0.0
    %876 = vmatprep.subr.mxu0 0.0
    %877 = vmatpush1.msra.mxu0 0.0
    %878 = vmatprep.subr.mxu0 0.0
    %879 = vmatpush1.msra.mxu0 0.0
    %880 = vmatprep.subr.mxu0 0.0
    %881 = vmatpush1.msra.mxu0 0.0
    %882 = vmatprep.subr.mxu0 0.0
    %883 = vmatpush1.msra.mxu0 0.0
    %884 = vmatprep.subr.mxu0 0.0
    %885 = vmatpush1.msra.mxu0 0.0
    %886 = vmatprep.subr.mxu0 0.0
    %887 = vmatpush1.msra.mxu0 0.0
    %888 = vmatprep.subr.mxu0 0.0
    %889 = vmatpush1.msra.mxu0 0.0
    %890 = vmatprep.subr.mxu0 0.0
    %891 = vmatpush1.msra.mxu0 0.0
    %892 = vmatprep.subr.mxu0 0.0
    %893 = vmatpush1.msra.mxu0 0.0
    %894 = vmatprep.subr.mxu0 0.0
    %895 = vmatpush1.msra.mxu0 0.0
    %896 = vmatprep.subr.mxu0 0.0
    %897 = vmatpush1.msra.mxu0 0.0
    %898 = vmatprep.subr.mxu0 0.0
    %899 = vmatpush1.msra.mxu0 0.0
    %900 = vmatprep.subr.mxu0 0.0
    %901 = vmatpush1.msra.mxu0 0.0
    %902 = vmatprep.subr.mxu0 0.0
    %903 = vmatpush1.msra.mxu0 0.0
    %904 = vmatprep.subr.mxu0 0.0
    %905 = vmatpush1.msra.mxu0 0.0
    %906 = vmatprep.subr.mxu0 0.0
    %907 = vmatpush1.msra.mxu0 0.0
    %908 = vmatprep.subr.mxu0 0.0
    %909 = vmatpush1.msra.mxu0 0.0
    %910 = vmatprep.subr.mxu0 0.0
    %911 = vmatpush1.msra.mxu0 0.0
    %912 = vmatprep.subr.mxu0 0.0
    %913 = vmatpush1.msra.mxu0 0.0
    %914 = vmatprep.subr.mxu0 0.0
    %915 = vmatpush1.msra.mxu0 0.0
    %916 = vmatprep.subr.mxu0 0.0
    %917 = vmatpush1.msra.mxu0 0.0
    %918 = vmatprep.subr.mxu0 0.0
    %919 = vmatpush1.msra.mxu0 0.0
    %920 = vmatprep.subr.mxu0 0.0
    %921 = vmatpush1.msra.mxu0 0.0
    %922 = vmatprep.subr.mxu0 0.0
    %923 = vmatpush1.msra.mxu0 0.0
    %924 = vmatprep.subr.mxu0 0.0
    %925 = vmatpush1.msra.mxu0 0.0
    %926 = vmatprep.mubr.f32.mxu0 0.0
    %927 = vmatmul.mubr.f32.gmra.mrb[0].mxu0 %v789
    %v928 = vpop.f32.mrb[0].mxu0
    %v929 = vadd.f32 %v783, %v928
    %v930 = vpop.f32.mrb[0].mxu0
    %931 = vdwg.mxu0
    %v932 = vxor.u32 %v858, 2147483648
    %v933 = vxor.u32 %v860, 2147483648
    %v934 = vxor.u32 %v929, 2147483648
    %v935 = vmul.f32 %v932, 1.442695
    %v936 = vpow.pop %v935
    %v937 = vmul.f32 %v933, 1.442695
    %v938 = vpow.pop %v937
    %v939 = vmul.f32 %v934, 1.442695
    %v940 = vpow.pop %v939
    %v941 = vadd.f32 %v936, 1.0
    %v942 = vadd.f32 %v938, 1.0
    %v943 = vadd.f32 %v940, 1.0
    %v944 = vrcp.pop %v941
    %v945 = vmul.f32 1.0, %v944
    %v946 = vrcp.pop %v942
    %v947 = vmul.f32 1.0, %v946
    %v948 = vrcp.pop %v943
    %v949 = vmul.f32 1.0, %v948
    %v950 = vmul.f32 %v546, %v945
    %v951 = vmul.f32 %v550, %v947
    %v952 = vmul.f32 %v554, %v949
    %v956 = vcombine.low %v950, %v951
    %v958 = vunpack.c.l.s4 1983009808
    %v959 = vunpack.c.0.s8 %v958
    %v960 = vlaneseq
    %v961 = vshrl.u32 %v960, 7
    %v962 = vsub.s32 %v959, %v961
    %v963 = vrot.slane %v956, %v962
    %v965 = vunpack.c.l.s4 1983009808
    %v966 = vunpack.c.0.s8 %v965
    %v967 = vlaneseq
    %v968 = vshrl.u32 %v967, 7
    %v969 = vsub.s32 %v966, %v968
    %v970 = vrot.slane %v952, %v969
    %v971 = vcombine.low %v963, %v970
    %973 = vst [vmem:[#allocation5] sm:$0x3f] %v971
    %vm974 = vcmask 779264
    %975 = vst.msk [vmem:[#allocation5 + $0x6] sm:$0x3] %vm974, %v105
    // Predicated region
    $region34: #{tpu_custom_call.1} parent=1 // pred_check
      _
    $region35: #{tpu_custom_call.1} parent=1 // pred_check_branch
      %977 = sbr.rel (0) target = $region37
    $region36: #{tpu_custom_call.1} parent=1 // pred_region
      %s979 = ssub.s32 128, 128
      %980 = vsyncadd [#allocation4], %s979
      %s982 = sshll.u32 [#allocation5], 4
      %s983 = int_to_ptr.vmem [resolvable:$true] %s982
      %985 = dma.vmem_to_hbm [thread:$0]  %s983, 128, %s7, [#allocation4]
    $region37: #{tpu_custom_call.1} parent=1 // pred_fallthru
      _
    // Predicated region
    $region38: #{tpu_custom_call.1} parent=1 // pred_check
      _
    $region39: #{tpu_custom_call.1} parent=1 // pred_check_branch
      %987 = sbr.rel (0) target = $region41
    $region40: #{tpu_custom_call.1} parent=1 // pred_region
      %988 = dma.done [#allocation4], 128
    $region41: #{tpu_custom_call.1} parent=1 // pred_fallthru
      _
    %989 = vsyncpa [#allocation3], 1
    %990 = vsyncpa [#allocation4], 1

</llo_original>
